<compile_context>
chip_gen: v7x
topology: tpu7x:2x2x1
jax: 0.10.0
libtpu: 0.0.40
codegen_flags: <defaults>
</compile_context>

<pallas_src>
import jax
import jax.numpy as jnp
from jax.experimental import pallas as pl
from jax.experimental.pallas import tpu as pltpu


def _round_up(x, m):
    return ((x + m - 1) // m) * m


def _dis_mlp_kernel(z_ref, w1_ref, b1_ref, w2_ref, b2_ref, o_ref):
    # Layer 1 on the MXU: (TILE_B, Kp) @ (Kp, Lp), f32 accumulation.
    h = jnp.dot(z_ref[...], w1_ref[...], preferred_element_type=jnp.float32)
    h = jnp.maximum(h + b1_ref[...], 0.0)            # b1 is (1, Lp), broadcasts over rows

    # Layer 2 (out_features == 1): VPU multiply + lane reduction (no N=1 matmul).
    logits = jnp.sum(h * w2_ref[...], axis=-1, keepdims=True)   # (TILE_B, 1)
    probs = jax.nn.sigmoid(logits + b2_ref[0])                  # b2 scalar from SMEM

    # Lane-dense store: one (1, TILE_B) row of the (num_tiles, TILE_B) output.
    o_ref[...] = jnp.transpose(probs).astype(o_ref.dtype)


def dis_model_forward(z, w1, b1, w2, b2, *, max_tile_b=512):
    """z: (B, 2*latent_dim) f32. Weights stored transposed vs PyTorch:
    w1 (2L, L), b1 (1, L), w2 (L, 1), b2 (1, 1). Returns (B, 1) f32."""
    assert max_tile_b % 128 == 0
    B, in_dim = z.shape
    L = w1.shape[1]
    assert w1.shape[0] == in_dim and w2.shape == (L, 1)

    f32 = jnp.float32
    Kp = _round_up(in_dim, 256)          # 240 -> 256 (one full MXU K pass on v6e/v7x)
    Lp = _round_up(L, 128)               # 120 -> 128 (full lane width)

    tile_b = min(max_tile_b, _round_up(B, 128))
    num_tiles = pl.cdiv(B, tile_b)
    B_pad = num_tiles * tile_b

    # Zero-pad once in the wrapper (padded lanes of b1 and w2 are zero, so the
    # padded hidden lanes cannot leak into the logit).
    z_p = jnp.zeros((B_pad, Kp), f32).at[:B, :in_dim].set(z.astype(f32))
    w1_p = jnp.zeros((Kp, Lp), f32).at[:in_dim, :L].set(w1.astype(f32))
    b1_p = jnp.zeros((1, Lp), f32).at[:, :L].set(b1.reshape(1, L).astype(f32))
    w2_p = jnp.zeros((1, Lp), f32).at[:, :L].set(w2.reshape(1, L).astype(f32))
    b2_p = jnp.reshape(b2, (-1,))[:1].astype(f32)    # (1,) scalar -> SMEM

    cost = pl.CostEstimate(
        flops=2 * B_pad * Kp * Lp + 3 * B_pad * Lp,
        transcendentals=B_pad,                          # sigmoid exp
        bytes_accessed=4 * (B_pad * Kp + Kp * Lp + 2 * Lp + 1 + B_pad),
    )

    out = pl.pallas_call(
        _dis_mlp_kernel,
        out_shape=jax.ShapeDtypeStruct((num_tiles, tile_b), f32),
        grid=(num_tiles,),
        in_specs=[
            pl.BlockSpec((tile_b, Kp), lambda i: (i, 0)),        # streamed z batch tile
            pl.BlockSpec((Kp, Lp), lambda i: (0, 0)),            # W1: VMEM-resident
            pl.BlockSpec((1, Lp), lambda i: (0, 0)),             # b1: VMEM-resident
            pl.BlockSpec((1, Lp), lambda i: (0, 0)),             # w2 row: VMEM-resident
            pl.BlockSpec(memory_space=pltpu.MemorySpace.SMEM),   # b2 scalar
        ],
        out_specs=pl.BlockSpec((1, tile_b), lambda i: (i, 0)),   # lane-dense output row
        compiler_params=pltpu.CompilerParams(
            dimension_semantics=("parallel",),
            vmem_limit_bytes=32 * 1024 * 1024,
        ),
        cost_estimate=cost,
    )(z_p, w1_p, b1_p, w2_p, b2_p)

    return out.reshape(-1)[:B].reshape(B, 1)


def init_params(key, latent_dim=120):
    """Mimics PyTorch's default Linear init (U(-1/sqrt(fan_in), +)); weights transposed."""
    k1, k2, k3, k4 = jax.random.split(key, 4)
    in1, out1 = 2 * latent_dim, latent_dim
    in2, out2 = latent_dim, 1
    bound1 = 1.0 / jnp.sqrt(in1)
    bound2 = 1.0 / jnp.sqrt(in2)
    w1 = jax.random.uniform(k1, (in1, out1), jnp.float32, -bound1, bound1)
    b1 = jax.random.uniform(k2, (1, out1), jnp.float32, -bound1, bound1)
    w2 = jax.random.uniform(k3, (in2, out2), jnp.float32, -bound2, bound2)
    b2 = jax.random.uniform(k4, (1, out2), jnp.float32, -bound2, bound2)
    return w1, b1, w2, b2


def reference_forward(z, w1, b1, w2, b2):
    h = jnp.maximum(z @ w1 + b1, 0.0)
    return jax.nn.sigmoid(h @ w2 + b2)


if __name__ == "__main__":
    latent_dim = 120
    batch = 8

    key = jax.random.PRNGKey(0)
    k_params, k_z = jax.random.split(key)
    w1, b1, w2, b2 = init_params(k_params, latent_dim)
    z = jax.random.normal(k_z, (batch, 2 * latent_dim), jnp.float32)

    out = dis_model_forward(z, w1, b1, w2, b2)
    out = jax.block_until_ready(out)

    ref = reference_forward(z, w1, b1, w2, b2)
    assert out.shape == (batch, 1)
    assert jnp.allclose(out, ref, atol=1e-5, rtol=1e-5), float(jnp.max(jnp.abs(out - ref)))

    print("KERNEL_OK")
</pallas_src>

<mosaic_0001>
module attributes {stable_mosaic.version = 11 : i64} {
  func.func @_dis_mlp_kernel(%arg0: i32, %arg1: memref<128x256xf32, #tpu.memory_space<vmem>>, %arg2: memref<256x128xf32, #tpu.memory_space<vmem>>, %arg3: memref<1x128xf32, #tpu.memory_space<vmem>>, %arg4: memref<1x128xf32, #tpu.memory_space<vmem>>, %arg5: memref<1xf32, #tpu.memory_space<smem>>, %arg6: memref<1x128xf32, #tpu.memory_space<vmem>>) attributes {dimension_semantics = [#tpu.dimension_semantics<parallel>], iteration_bounds = array<i64: 1>, scalar_prefetch = 0 : i64, scratch_operands = 0 : i64, tpu.core_type = #tpu.core_type<tc>, window_params = [{transform_indices = @transform_0, window_bounds = array<i64: 128, 256>}, {pipeline_mode = #tpu.pipeline_mode<synchronous>, transform_indices = @transform_1, window_bounds = array<i64: 256, 128>}, {pipeline_mode = #tpu.pipeline_mode<synchronous>, transform_indices = @transform_2, window_bounds = array<i64: 1, 128>}, {pipeline_mode = #tpu.pipeline_mode<synchronous>, transform_indices = @transform_3, window_bounds = array<i64: 1, 128>}, {transform_indices = @transform_4, window_bounds = array<i64: 1>}, {transform_indices = @transform_5, window_bounds = array<i64: 1, 128>}]} {
    %c0 = arith.constant 0 : index
    %c0_0 = arith.constant 0 : index
    %0 = vector.load %arg1[%c0, %c0_0] : memref<128x256xf32, #tpu.memory_space<vmem>>, vector<128x256xf32>
    %c0_1 = arith.constant 0 : index
    %c0_2 = arith.constant 0 : index
    %1 = vector.load %arg2[%c0_1, %c0_2] : memref<256x128xf32, #tpu.memory_space<vmem>>, vector<256x128xf32>
    %cst = arith.constant dense<0.000000e+00> : vector<128x128xf32>
    %2 = tpu.matmul %0, %1, %cst {dimension_numbers = #tpu.dot_dimension_numbers<[1], [0], [0], [1], [0, 0, 1, 1], [], []>} : vector<128x256xf32>, vector<256x128xf32>, vector<128x128xf32> -> vector<128x128xf32>
    %c0_3 = arith.constant 0 : index
    %c0_4 = arith.constant 0 : index
    %3 = vector.load %arg3[%c0_3, %c0_4] : memref<1x128xf32, #tpu.memory_space<vmem>>, vector<1x128xf32>
    %4 = vector.broadcast %3 : vector<1x128xf32> to vector<128x128xf32>
    %5 = arith.addf %2, %4 : vector<128x128xf32>
    %cst_5 = arith.constant 0.000000e+00 : f32
    %6 = vector.broadcast %cst_5 : f32 to vector<128x128xf32>
    %7 = arith.maximumf %5, %6 : vector<128x128xf32>
    %c0_6 = arith.constant 0 : index
    %c0_7 = arith.constant 0 : index
    %8 = vector.load %arg4[%c0_6, %c0_7] : memref<1x128xf32, #tpu.memory_space<vmem>>, vector<1x128xf32>
    %9 = vector.broadcast %8 : vector<1x128xf32> to vector<128x128xf32>
    %10 = arith.mulf %7, %9 : vector<128x128xf32>
    %cst_8 = arith.constant dense<0.000000e+00> : vector<128xf32>
    %11 = vector.multi_reduction <add>, %10, %cst_8 [1] : vector<128x128xf32> to vector<128xf32>
    %12 = vector.shape_cast %11 : vector<128xf32> to vector<128x1xf32>
    %c0_9 = arith.constant 0 : index
    %13 = memref.load %arg5[%c0_9] : memref<1xf32, #tpu.memory_space<smem>>
    %14 = vector.broadcast %13 : f32 to vector<128x1xf32>
    %15 = arith.addf %12, %14 : vector<128x1xf32>
    %16 = arith.negf %15 : vector<128x1xf32>
    %17 = math.exp %16 : vector<128x1xf32>
    %cst_10 = arith.constant 1.000000e+00 : f32
    %18 = vector.broadcast %cst_10 : f32 to vector<128x1xf32>
    %19 = arith.addf %18, %17 : vector<128x1xf32>
    %20 = arith.divf %18, %19 : vector<128x1xf32>
    %21 = tpu.transpose %20, [1, 0] : vector<128x1xf32> -> vector<1x128xf32>
    %c0_11 = arith.constant 0 : index
    %c0_12 = arith.constant 0 : index
    %22 = vector.load %arg6[%c0_11, %c0_12] : memref<1x128xf32, #tpu.memory_space<vmem>>, vector<1x128xf32>
    tpu.vector_store %arg6[%c0_11, %c0_12], %21 {strides = array<i32>} : memref<1x128xf32, #tpu.memory_space<vmem>>, vector<1x128xf32>,
    return
  }
  func.func @transform_0(%arg0: i32) -> (i32, i32) {
    %c0_i32 = arith.constant 0 : i32
    %c0_i32_0 = arith.constant 0 : i32
    return %arg0, %c0_i32 : i32, i32
  }
  func.func @transform_1(%arg0: i32) -> (i32, i32) {
    %c0_i32 = arith.constant 0 : i32
    %c0_i32_0 = arith.constant 0 : i32
    %c0_i32_1 = arith.constant 0 : i32
    return %c0_i32, %c0_i32_0 : i32, i32
  }
  func.func @transform_2(%arg0: i32) -> (i32, i32) {
    %c0_i32 = arith.constant 0 : i32
    %c0_i32_0 = arith.constant 0 : i32
    %c0_i32_1 = arith.constant 0 : i32
    return %c0_i32, %c0_i32_0 : i32, i32
  }
  func.func @transform_3(%arg0: i32) -> (i32, i32) {
    %c0_i32 = arith.constant 0 : i32
    %c0_i32_0 = arith.constant 0 : i32
    %c0_i32_1 = arith.constant 0 : i32
    return %c0_i32, %c0_i32_0 : i32, i32
  }
  func.func @transform_4(%arg0: i32) -> i32 {
    %c0_i32 = arith.constant 0 : i32
    %c0_i32_0 = arith.constant 0 : i32
    return %c0_i32 : i32
  }
  func.func @transform_5(%arg0: i32) -> (i32, i32) {
    %c0_i32 = arith.constant 0 : i32
    %c0_i32_0 = arith.constant 0 : i32
    return %arg0, %c0_i32 : i32, i32
  }
}

</mosaic_0001>

<llo_original>
// kernel: tpu_custom_call.1
$region0: #{tpu_custom_call.1}
  #allocation0 [shape = 'u32[]', space=smem, size = 0x4, offset = 0x4, fixed_abs, tag = 'smem constant byte address 0x4 - core index']
  #allocation1 [shape = 'u32[144,128]{1,0:T(1,128)}', space=vmem, size = 0x12000, scoped, tag = 'internal scratch']
  #allocation2 [shape = 'f32[1]{0:T(128)S(6)}', space=smem, size = 0x200, scoped, tag = 'scoped memory for tpu_custom_call.1']
  %s0 = inlined_call_operand.hbm [shape: f32[128,256], index: 0, kind: input, shape index: {}]
  %s1 = inlined_call_operand.hbm [shape: f32[256,128], index: 1, kind: input, shape index: {}]
  %s2 = inlined_call_operand.vmem [shape: f32[1,128], index: 2, kind: input, shape index: {}]
  %s3 = inlined_call_operand.vmem [shape: f32[1,128], index: 3, kind: input, shape index: {}]
  %s4 = inlined_call_operand.<no memory space> [shape: f32[1], index: 4, kind: input, shape index: {}]
  %s5 = inlined_call_operand.hbm [shape: f32[1,128], index: 5, kind: output, shape index: {}]
  %s6 = sld [smem:[#allocation0]]
  $region38: #{tpu_custom_call.1} parent=0
    _
  %s8 = ssub.s32 1, %s6
  %s9 = scalar_select 0, %s8, %s6
  %10 = sst [smem:[#allocation2]] %s4
  $region1: #{tpu_custom_call.1} parent=0
    #allocation3 [shape = 'u8[131072]{0}', space=vmem, size = 0x20000, scoped, tag = 'input window, operand 0, single buffered']
    #allocation4 [shape = 's32[1]{0}', space=sflag, size = 0x4, scoped, tag = 'scoped memory for tpu_custom_call.1']
    #allocation5 [shape = 's32[1]{0}', space=sflag, size = 0x4, scoped, tag = 'scoped memory for tpu_custom_call.1']
    #allocation6 [shape = 'u8[131072]{0}', space=vmem, size = 0x20000, scoped, tag = 'input window, operand 1, single buffered']
    #allocation7 [shape = 's32[1]{0}', space=sflag, size = 0x4, scoped, tag = 'scoped memory for tpu_custom_call.1']
    #allocation8 [shape = 'u8[512]{0}', space=vmem, size = 0x400, scoped, tag = 'output window, operand 0, single buffered']
    %11 = vsyncpa [#allocation4], 0
    %12 = vsyncpa [#allocation7], 0
    %13 = vsyncpa [#allocation5], 0
    // Predicated region
    $region2: #{tpu_custom_call.1} parent=1 // pred_check
      _
    $region3: #{tpu_custom_call.1} parent=1 // pred_check_branch
      %15 = sbr.rel (0) target = $region5
    $region4: #{tpu_custom_call.1} parent=1 // pred_region
      %s17 = ssub.s32 4096, 4096
      %18 = vsyncadd [#allocation4], %s17
      %s19 = sshll.u32 [#allocation3], 4
      %s20 = int_to_ptr.vmem [resolvable:$true] %s19
      %25 = dma.hbm_to_vmem [thread:$0]  %s0, 4096, %s20, [#allocation4], 256, 256, 16
    $region5: #{tpu_custom_call.1} parent=1 // pred_fallthru
      _
    // Predicated region
    $region6: #{tpu_custom_call.1} parent=1 // pred_check
      _
    $region7: #{tpu_custom_call.1} parent=1 // pred_check_branch
      %27 = sbr.rel (0) target = $region9
    $region8: #{tpu_custom_call.1} parent=1 // pred_region
      %s29 = ssub.s32 4096, 4096
      %30 = vsyncadd [#allocation7], %s29
      %s31 = sshll.u32 [#allocation6], 4
      %s32 = int_to_ptr.vmem [resolvable:$true] %s31
      %37 = dma.hbm_to_vmem [thread:$0]  %s1, 4096, %s32, [#allocation7], 128, 128, 8
    $region9: #{tpu_custom_call.1} parent=1 // pred_fallthru
      _
    // Predicated region
    $region10: #{tpu_custom_call.1} parent=1 // pred_check
      _
    $region11: #{tpu_custom_call.1} parent=1 // pred_check_branch
      %39 = sbr.rel (0) target = $region13
    $region12: #{tpu_custom_call.1} parent=1 // pred_region
      _
    $region13: #{tpu_custom_call.1} parent=1 // pred_fallthru
      _
    // Predicated region
    $region14: #{tpu_custom_call.1} parent=1 // pred_check
      _
    $region15: #{tpu_custom_call.1} parent=1 // pred_check_branch
      %41 = sbr.rel (0) target = $region17
    $region16: #{tpu_custom_call.1} parent=1 // pred_region
      _
    $region17: #{tpu_custom_call.1} parent=1 // pred_fallthru
      _
    // Predicated region
    $region18: #{tpu_custom_call.1} parent=1 // pred_check
      _
    $region19: #{tpu_custom_call.1} parent=1 // pred_check_branch
      %43 = sbr.rel (0) target = $region21
    $region20: #{tpu_custom_call.1} parent=1 // pred_region
      _
    $region21: #{tpu_custom_call.1} parent=1 // pred_fallthru
      _
    // Predicated region
    $region22: #{tpu_custom_call.1} parent=1 // pred_check
      _
    $region23: #{tpu_custom_call.1} parent=1 // pred_check_branch
      %45 = sbr.rel (0) target = $region25
    $region24: #{tpu_custom_call.1} parent=1 // pred_region
      %46 = dma.done [#allocation4], 4096
    $region25: #{tpu_custom_call.1} parent=1 // pred_fallthru
      _
    // Predicated region
    $region26: #{tpu_custom_call.1} parent=1 // pred_check
      _
    $region27: #{tpu_custom_call.1} parent=1 // pred_check_branch
      %48 = sbr.rel (0) target = $region29
    $region28: #{tpu_custom_call.1} parent=1 // pred_region
      %49 = dma.done [#allocation7], 4096
    $region29: #{tpu_custom_call.1} parent=1 // pred_fallthru
      _
    %v50 = vld [vmem:[#allocation3] sm:$0xff]
    %v51 = vld [vmem:[#allocation3 + $0x8] sm:$0xff]
    %v52 = vld [vmem:[#allocation3 + $0x10] sm:$0xff]
    %v53 = vld [vmem:[#allocation3 + $0x18] sm:$0xff]
    %v54 = vld [vmem:[#allocation3 + $0x20] sm:$0xff]
    %v55 = vld [vmem:[#allocation3 + $0x28] sm:$0xff]
    %v56 = vld [vmem:[#allocation3 + $0x30] sm:$0xff]
    %v57 = vld [vmem:[#allocation3 + $0x38] sm:$0xff]
    %v58 = vld [vmem:[#allocation3 + $0x40] sm:$0xff]
    %v59 = vld [vmem:[#allocation3 + $0x48] sm:$0xff]
    %v60 = vld [vmem:[#allocation3 + $0x50] sm:$0xff]
    %v61 = vld [vmem:[#allocation3 + $0x58] sm:$0xff]
    %v62 = vld [vmem:[#allocation3 + $0x60] sm:$0xff]
    %v63 = vld [vmem:[#allocation3 + $0x68] sm:$0xff]
    %v64 = vld [vmem:[#allocation3 + $0x70] sm:$0xff]
    %v65 = vld [vmem:[#allocation3 + $0x78] sm:$0xff]
    %v66 = vld [vmem:[#allocation3 + $0x80] sm:$0xff]
    %v67 = vld [vmem:[#allocation3 + $0x88] sm:$0xff]
    %v68 = vld [vmem:[#allocation3 + $0x90] sm:$0xff]
    %v69 = vld [vmem:[#allocation3 + $0x98] sm:$0xff]
    %v70 = vld [vmem:[#allocation3 + $0xa0] sm:$0xff]
    %v71 = vld [vmem:[#allocation3 + $0xa8] sm:$0xff]
    %v72 = vld [vmem:[#allocation3 + $0xb0] sm:$0xff]
    %v73 = vld [vmem:[#allocation3 + $0xb8] sm:$0xff]
    %v74 = vld [vmem:[#allocation3 + $0xc0] sm:$0xff]
    %v75 = vld [vmem:[#allocation3 + $0xc8] sm:$0xff]
    %v76 = vld [vmem:[#allocation3 + $0xd0] sm:$0xff]
    %v77 = vld [vmem:[#allocation3 + $0xd8] sm:$0xff]
    %v78 = vld [vmem:[#allocation3 + $0xe0] sm:$0xff]
    %v79 = vld [vmem:[#allocation3 + $0xe8] sm:$0xff]
    %v80 = vld [vmem:[#allocation3 + $0xf0] sm:$0xff]
    %v81 = vld [vmem:[#allocation3 + $0xf8] sm:$0xff]
    %v82 = vld [vmem:[#allocation6] sm:$0xff]
    %v83 = vld [vmem:[#allocation6 + $0x8] sm:$0xff]
    %v84 = vld [vmem:[#allocation6 + $0x10] sm:$0xff]
    %v85 = vld [vmem:[#allocation6 + $0x18] sm:$0xff]
    %v86 = vld [vmem:[#allocation6 + $0x20] sm:$0xff]
    %v87 = vld [vmem:[#allocation6 + $0x28] sm:$0xff]
    %v88 = vld [vmem:[#allocation6 + $0x30] sm:$0xff]
    %v89 = vld [vmem:[#allocation6 + $0x38] sm:$0xff]
    %v90 = vld [vmem:[#allocation6 + $0x40] sm:$0xff]
    %v91 = vld [vmem:[#allocation6 + $0x48] sm:$0xff]
    %v92 = vld [vmem:[#allocation6 + $0x50] sm:$0xff]
    %v93 = vld [vmem:[#allocation6 + $0x58] sm:$0xff]
    %v94 = vld [vmem:[#allocation6 + $0x60] sm:$0xff]
    %v95 = vld [vmem:[#allocation6 + $0x68] sm:$0xff]
    %v96 = vld [vmem:[#allocation6 + $0x70] sm:$0xff]
    %v97 = vld [vmem:[#allocation6 + $0x78] sm:$0xff]
    %v98 = vld [vmem:[#allocation6 + $0x80] sm:$0xff]
    %v99 = vld [vmem:[#allocation6 + $0x88] sm:$0xff]
    %v100 = vld [vmem:[#allocation6 + $0x90] sm:$0xff]
    %v101 = vld [vmem:[#allocation6 + $0x98] sm:$0xff]
    %v102 = vld [vmem:[#allocation6 + $0xa0] sm:$0xff]
    %v103 = vld [vmem:[#allocation6 + $0xa8] sm:$0xff]
    %v104 = vld [vmem:[#allocation6 + $0xb0] sm:$0xff]
    %v105 = vld [vmem:[#allocation6 + $0xb8] sm:$0xff]
    %v106 = vld [vmem:[#allocation6 + $0xc0] sm:$0xff]
    %v107 = vld [vmem:[#allocation6 + $0xc8] sm:$0xff]
    %v108 = vld [vmem:[#allocation6 + $0xd0] sm:$0xff]
    %v109 = vld [vmem:[#allocation6 + $0xd8] sm:$0xff]
    %v110 = vld [vmem:[#allocation6 + $0xe0] sm:$0xff]
    %v111 = vld [vmem:[#allocation6 + $0xe8] sm:$0xff]
    %v112 = vld [vmem:[#allocation6 + $0xf0] sm:$0xff]
    %v113 = vld [vmem:[#allocation6 + $0xf8] sm:$0xff]
    %v114 = vld [vmem:[%s2] sm:$0x1]
    %v116 = vlaneseq
    %v117 = vshrl.u32 %v116, 7
    %v118 = vsub.s32 0, %v117
    %v119 = vrot.slane %v114, %v118
    %121 = vmatprep.subr.mxu0 0.0
    %122 = vmatpush1.msra.mxu0 %v82
    %123 = vmatprep.subr.mxu0 0.0
    %124 = vmatpush1.msra.mxu0 %v83
    %125 = vmatprep.subr.mxu0 0.0
    %126 = vmatpush1.msra.mxu0 %v84
    %127 = vmatprep.subr.mxu0 0.0
    %128 = vmatpush1.msra.mxu0 %v85
    %129 = vmatprep.subr.mxu0 0.0
    %130 = vmatpush1.msra.mxu0 %v86
    %131 = vmatprep.subr.mxu0 0.0
    %132 = vmatpush1.msra.mxu0 %v87
    %133 = vmatprep.subr.mxu0 0.0
    %134 = vmatpush1.msra.mxu0 %v88
    %135 = vmatprep.subr.mxu0 0.0
    %136 = vmatpush1.msra.mxu0 %v89
    %137 = vmatprep.subr.mxu0 0.0
    %138 = vmatpush1.msra.mxu0 %v90
    %139 = vmatprep.subr.mxu0 0.0
    %140 = vmatpush1.msra.mxu0 %v91
    %141 = vmatprep.subr.mxu0 0.0
    %142 = vmatpush1.msra.mxu0 %v92
    %143 = vmatprep.subr.mxu0 0.0
    %144 = vmatpush1.msra.mxu0 %v93
    %145 = vmatprep.subr.mxu0 0.0
    %146 = vmatpush1.msra.mxu0 %v94
    %147 = vmatprep.subr.mxu0 0.0
    %148 = vmatpush1.msra.mxu0 %v95
    %149 = vmatprep.subr.mxu0 0.0
    %150 = vmatpush1.msra.mxu0 %v96
    %151 = vmatprep.subr.mxu0 0.0
    %152 = vmatpush1.msra.mxu0 %v97
    %153 = vmatprep.subr.mxu0 0.0
    %154 = vmatpush1.msra.mxu0 %v98
    %155 = vmatprep.subr.mxu0 0.0
    %156 = vmatpush1.msra.mxu0 %v99
    %157 = vmatprep.subr.mxu0 0.0
    %158 = vmatpush1.msra.mxu0 %v100
    %159 = vmatprep.subr.mxu0 0.0
    %160 = vmatpush1.msra.mxu0 %v101
    %161 = vmatprep.subr.mxu0 0.0
    %162 = vmatpush1.msra.mxu0 %v102
    %163 = vmatprep.subr.mxu0 0.0
    %164 = vmatpush1.msra.mxu0 %v103
    %165 = vmatprep.subr.mxu0 0.0
    %166 = vmatpush1.msra.mxu0 %v104
    %167 = vmatprep.subr.mxu0 0.0
    %168 = vmatpush1.msra.mxu0 %v105
    %169 = vmatprep.subr.mxu0 0.0
    %170 = vmatpush1.msra.mxu0 %v106
    %171 = vmatprep.subr.mxu0 0.0
    %172 = vmatpush1.msra.mxu0 %v107
    %173 = vmatprep.subr.mxu0 0.0
    %174 = vmatpush1.msra.mxu0 %v108
    %175 = vmatprep.subr.mxu0 0.0
    %176 = vmatpush1.msra.mxu0 %v109
    %177 = vmatprep.subr.mxu0 0.0
    %178 = vmatpush1.msra.mxu0 %v110
    %179 = vmatprep.subr.mxu0 0.0
    %180 = vmatpush1.msra.mxu0 %v111
    %181 = vmatprep.subr.mxu0 0.0
    %182 = vmatpush1.msra.mxu0 %v112
    %183 = vmatprep.subr.mxu0 0.0
    %184 = vmatpush1.msra.mxu0 %v113
    %185 = vmatprep.mubr.f32.mxu0 %v51
    %186 = vmatmul.mubr.f32.gmra.mrb[0].mxu0 %v50
    %v187 = vpop.f32.mrb[0].mxu0
    %v188 = vadd.f32 %v119, %v187
    %v189 = vpop.f32.mrb[0].mxu0
    %190 = vmatprep.mubr.f32.mxu0 %v53
    %191 = vmatmul.mubr.f32.gmra.mrb[0].mxu0 %v52
    %v192 = vpop.f32.mrb[0].mxu0
    %v193 = vadd.f32 %v119, %v192
    %v194 = vpop.f32.mrb[0].mxu0
    %195 = vmatprep.mubr.f32.mxu0 %v55
    %196 = vmatmul.mubr.f32.gmra.mrb[0].mxu0 %v54
    %v197 = vpop.f32.mrb[0].mxu0
    %v198 = vadd.f32 %v119, %v197
    %v199 = vpop.f32.mrb[0].mxu0
    %200 = vmatprep.mubr.f32.mxu0 %v57
    %201 = vmatmul.mubr.f32.gmra.mrb[0].mxu0 %v56
    %v202 = vpop.f32.mrb[0].mxu0
    %v203 = vadd.f32 %v119, %v202
    %v204 = vpop.f32.mrb[0].mxu0
    %205 = vmatprep.mubr.f32.mxu0 %v59
    %206 = vmatmul.mubr.f32.gmra.mrb[0].mxu0 %v58
    %v207 = vpop.f32.mrb[0].mxu0
    %v208 = vadd.f32 %v119, %v207
    %v209 = vpop.f32.mrb[0].mxu0
    %210 = vmatprep.mubr.f32.mxu0 %v61
    %211 = vmatmul.mubr.f32.gmra.mrb[0].mxu0 %v60
    %v212 = vpop.f32.mrb[0].mxu0
    %v213 = vadd.f32 %v119, %v212
    %v214 = vpop.f32.mrb[0].mxu0
    %215 = vmatprep.mubr.f32.mxu0 %v63
    %216 = vmatmul.mubr.f32.gmra.mrb[0].mxu0 %v62
    %v217 = vpop.f32.mrb[0].mxu0
    %v218 = vadd.f32 %v119, %v217
    %v219 = vpop.f32.mrb[0].mxu0
    %220 = vmatprep.mubr.f32.mxu0 %v65
    %221 = vmatmul.mubr.f32.gmra.mrb[0].mxu0 %v64
    %v222 = vpop.f32.mrb[0].mxu0
    %v223 = vadd.f32 %v119, %v222
    %v224 = vpop.f32.mrb[0].mxu0
    %225 = vmatprep.mubr.f32.mxu0 %v67
    %226 = vmatmul.mubr.f32.gmra.mrb[0].mxu0 %v66
    %v227 = vpop.f32.mrb[0].mxu0
    %v228 = vadd.f32 %v119, %v227
    %v229 = vpop.f32.mrb[0].mxu0
    %230 = vmatprep.mubr.f32.mxu0 %v69
    %231 = vmatmul.mubr.f32.gmra.mrb[0].mxu0 %v68
    %v232 = vpop.f32.mrb[0].mxu0
    %v233 = vadd.f32 %v119, %v232
    %v234 = vpop.f32.mrb[0].mxu0
    %235 = vmatprep.mubr.f32.mxu0 %v71
    %236 = vmatmul.mubr.f32.gmra.mrb[0].mxu0 %v70
    %v237 = vpop.f32.mrb[0].mxu0
    %v238 = vadd.f32 %v119, %v237
    %v239 = vpop.f32.mrb[0].mxu0
    %240 = vmatprep.mubr.f32.mxu0 %v73
    %241 = vmatmul.mubr.f32.gmra.mrb[0].mxu0 %v72
    %v242 = vpop.f32.mrb[0].mxu0
    %v243 = vadd.f32 %v119, %v242
    %v244 = vpop.f32.mrb[0].mxu0
    %245 = vmatprep.mubr.f32.mxu0 %v75
    %246 = vmatmul.mubr.f32.gmra.mrb[0].mxu0 %v74
    %v247 = vpop.f32.mrb[0].mxu0
    %v248 = vadd.f32 %v119, %v247
    %v249 = vpop.f32.mrb[0].mxu0
    %250 = vmatprep.mubr.f32.mxu0 %v77
    %251 = vmatmul.mubr.f32.gmra.mrb[0].mxu0 %v76
    %v252 = vpop.f32.mrb[0].mxu0
    %v253 = vadd.f32 %v119, %v252
    %v254 = vpop.f32.mrb[0].mxu0
    %255 = vmatprep.mubr.f32.mxu0 %v79
    %256 = vmatmul.mubr.f32.gmra.mrb[0].mxu0 %v78
    %v257 = vpop.f32.mrb[0].mxu0
    %v258 = vadd.f32 %v119, %v257
    %v259 = vpop.f32.mrb[0].mxu0
    %260 = vmatprep.mubr.f32.mxu0 %v81
    %261 = vmatmul.mubr.f32.gmra.mrb[0].mxu0 %v80
    %v262 = vpop.f32.mrb[0].mxu0
    %v263 = vadd.f32 %v119, %v262
    %v264 = vpop.f32.mrb[0].mxu0
    %265 = vdwg.mxu0
    %v266 = vmax.f32 %v188, 0.0
    %v267 = vmax.f32 %v193, 0.0
    %v268 = vmax.f32 %v198, 0.0
    %v269 = vmax.f32 %v203, 0.0
    %v270 = vmax.f32 %v208, 0.0
    %v271 = vmax.f32 %v213, 0.0
    %v272 = vmax.f32 %v218, 0.0
    %v273 = vmax.f32 %v223, 0.0
    %v274 = vmax.f32 %v228, 0.0
    %v275 = vmax.f32 %v233, 0.0
    %v276 = vmax.f32 %v238, 0.0
    %v277 = vmax.f32 %v243, 0.0
    %v278 = vmax.f32 %v248, 0.0
    %v279 = vmax.f32 %v253, 0.0
    %v280 = vmax.f32 %v258, 0.0
    %v281 = vmax.f32 %v263, 0.0
    %v282 = vld [vmem:[%s3] sm:$0x1]
    %v284 = vlaneseq
    %v285 = vshrl.u32 %v284, 7
    %v286 = vsub.s32 0, %v285
    %v287 = vrot.slane %v282, %v286
    %v289 = vmul.f32 %v266, %v287
    %v290 = vmul.f32 %v267, %v287
    %v291 = vmul.f32 %v268, %v287
    %v292 = vmul.f32 %v269, %v287
    %v293 = vmul.f32 %v270, %v287
    %v294 = vmul.f32 %v271, %v287
    %v295 = vmul.f32 %v272, %v287
    %v296 = vmul.f32 %v273, %v287
    %v297 = vmul.f32 %v274, %v287
    %v298 = vmul.f32 %v275, %v287
    %v299 = vmul.f32 %v276, %v287
    %v300 = vmul.f32 %v277, %v287
    %v301 = vmul.f32 %v278, %v287
    %v302 = vmul.f32 %v279, %v287
    %v303 = vmul.f32 %v280, %v287
    %v304 = vmul.f32 %v281, %v287
    %305 = vadd.xlane.f32.xlu0 %v289
    %v306 = vpop.xlane.xlu0 %305
    %307 = vadd.xlane.f32.xlu0 %v290
    %v308 = vpop.xlane.xlu0 %307
    %309 = vadd.xlane.f32.xlu0 %v291
    %v310 = vpop.xlane.xlu0 %309
    %311 = vadd.xlane.f32.xlu0 %v292
    %v312 = vpop.xlane.xlu0 %311
    %313 = vadd.xlane.f32.xlu0 %v293
    %v314 = vpop.xlane.xlu0 %313
    %315 = vadd.xlane.f32.xlu0 %v294
    %v316 = vpop.xlane.xlu0 %315
    %317 = vadd.xlane.f32.xlu0 %v295
    %v318 = vpop.xlane.xlu0 %317
    %319 = vadd.xlane.f32.xlu0 %v296
    %v320 = vpop.xlane.xlu0 %319
    %321 = vadd.xlane.f32.xlu0 %v297
    %v322 = vpop.xlane.xlu0 %321
    %323 = vadd.xlane.f32.xlu0 %v298
    %v324 = vpop.xlane.xlu0 %323
    %325 = vadd.xlane.f32.xlu0 %v299
    %v326 = vpop.xlane.xlu0 %325
    %327 = vadd.xlane.f32.xlu0 %v300
    %v328 = vpop.xlane.xlu0 %327
    %329 = vadd.xlane.f32.xlu0 %v301
    %v330 = vpop.xlane.xlu0 %329
    %331 = vadd.xlane.f32.xlu0 %v302
    %v332 = vpop.xlane.xlu0 %331
    %333 = vadd.xlane.f32.xlu0 %v303
    %v334 = vpop.xlane.xlu0 %333
    %335 = vadd.xlane.f32.xlu0 %v304
    %v336 = vpop.xlane.xlu0 %335
    %s337 = sld [smem:[#allocation2]]
    %v338 = vstv %s337
    %v339 = vadd.f32 %v306, %v338
    %v340 = vadd.f32 %v308, %v338
    %v341 = vadd.f32 %v310, %v338
    %v342 = vadd.f32 %v312, %v338
    %v343 = vadd.f32 %v314, %v338
    %v344 = vadd.f32 %v316, %v338
    %v345 = vadd.f32 %v318, %v338
    %v346 = vadd.f32 %v320, %v338
    %v347 = vadd.f32 %v322, %v338
    %v348 = vadd.f32 %v324, %v338
    %v349 = vadd.f32 %v326, %v338
    %v350 = vadd.f32 %v328, %v338
    %v351 = vadd.f32 %v330, %v338
    %v352 = vadd.f32 %v332, %v338
    %v353 = vadd.f32 %v334, %v338
    %v354 = vadd.f32 %v336, %v338
    %v355 = vxor.u32 %v339, 2147483648
    %v356 = vxor.u32 %v340, 2147483648
    %v357 = vxor.u32 %v341, 2147483648
    %v358 = vxor.u32 %v342, 2147483648
    %v359 = vxor.u32 %v343, 2147483648
    %v360 = vxor.u32 %v344, 2147483648
    %v361 = vxor.u32 %v345, 2147483648
    %v362 = vxor.u32 %v346, 2147483648
    %v363 = vxor.u32 %v347, 2147483648
    %v364 = vxor.u32 %v348, 2147483648
    %v365 = vxor.u32 %v349, 2147483648
    %v366 = vxor.u32 %v350, 2147483648
    %v367 = vxor.u32 %v351, 2147483648
    %v368 = vxor.u32 %v352, 2147483648
    %v369 = vxor.u32 %v353, 2147483648
    %v370 = vxor.u32 %v354, 2147483648
    %v371 = vmul.f32 %v355, 1.442695
    %v372 = vpow.pop %v371
    %v373 = vmul.f32 %v356, 1.442695
    %v374 = vpow.pop %v373
    %v375 = vmul.f32 %v357, 1.442695
    %v376 = vpow.pop %v375
    %v377 = vmul.f32 %v358, 1.442695
    %v378 = vpow.pop %v377
    %v379 = vmul.f32 %v359, 1.442695
    %v380 = vpow.pop %v379
    %v381 = vmul.f32 %v360, 1.442695
    %v382 = vpow.pop %v381
    %v383 = vmul.f32 %v361, 1.442695
    %v384 = vpow.pop %v383
    %v385 = vmul.f32 %v362, 1.442695
    %v386 = vpow.pop %v385
    %v387 = vmul.f32 %v363, 1.442695
    %v388 = vpow.pop %v387
    %v389 = vmul.f32 %v364, 1.442695
    %v390 = vpow.pop %v389
    %v391 = vmul.f32 %v365, 1.442695
    %v392 = vpow.pop %v391
    %v393 = vmul.f32 %v366, 1.442695
    %v394 = vpow.pop %v393
    %v395 = vmul.f32 %v367, 1.442695
    %v396 = vpow.pop %v395
    %v397 = vmul.f32 %v368, 1.442695
    %v398 = vpow.pop %v397
    %v399 = vmul.f32 %v369, 1.442695
    %v400 = vpow.pop %v399
    %v401 = vmul.f32 %v370, 1.442695
    %v402 = vpow.pop %v401
    %v403 = vadd.f32 %v372, 1.0
    %v404 = vadd.f32 %v374, 1.0
    %v405 = vadd.f32 %v376, 1.0
    %v406 = vadd.f32 %v378, 1.0
    %v407 = vadd.f32 %v380, 1.0
    %v408 = vadd.f32 %v382, 1.0
    %v409 = vadd.f32 %v384, 1.0
    %v410 = vadd.f32 %v386, 1.0
    %v411 = vadd.f32 %v388, 1.0
    %v412 = vadd.f32 %v390, 1.0
    %v413 = vadd.f32 %v392, 1.0
    %v414 = vadd.f32 %v394, 1.0
    %v415 = vadd.f32 %v396, 1.0
    %v416 = vadd.f32 %v398, 1.0
    %v417 = vadd.f32 %v400, 1.0
    %v418 = vadd.f32 %v402, 1.0
    %v419 = vrcp.pop %v403
    %v420 = vmul.f32 1.0, %v419
    %v421 = vrcp.pop %v404
    %v422 = vmul.f32 1.0, %v421
    %v423 = vrcp.pop %v405
    %v424 = vmul.f32 1.0, %v423
    %v425 = vrcp.pop %v406
    %v426 = vmul.f32 1.0, %v425
    %v427 = vrcp.pop %v407
    %v428 = vmul.f32 1.0, %v427
    %v429 = vrcp.pop %v408
    %v430 = vmul.f32 1.0, %v429
    %v431 = vrcp.pop %v409
    %v432 = vmul.f32 1.0, %v431
    %v433 = vrcp.pop %v410
    %v434 = vmul.f32 1.0, %v433
    %v435 = vrcp.pop %v411
    %v436 = vmul.f32 1.0, %v435
    %v437 = vrcp.pop %v412
    %v438 = vmul.f32 1.0, %v437
    %v439 = vrcp.pop %v413
    %v440 = vmul.f32 1.0, %v439
    %v441 = vrcp.pop %v414
    %v442 = vmul.f32 1.0, %v441
    %v443 = vrcp.pop %v415
    %v444 = vmul.f32 1.0, %v443
    %v445 = vrcp.pop %v416
    %v446 = vmul.f32 1.0, %v445
    %v447 = vrcp.pop %v417
    %v448 = vmul.f32 1.0, %v447
    %v449 = vrcp.pop %v418
    %v450 = vmul.f32 1.0, %v449
    %451 = vxpose.xlu0.b32.start [1/16] %v420, 128
    %452 = vxpose.xlu0.b32.cont [2/16] %v422, 128
    %453 = vxpose.xlu0.b32.cont [3/16] %v424, 128
    %454 = vxpose.xlu0.b32.cont [4/16] %v426, 128
    %455 = vxpose.xlu0.b32.cont [5/16] %v428, 128
    %456 = vxpose.xlu0.b32.cont [6/16] %v430, 128
    %457 = vxpose.xlu0.b32.cont [7/16] %v432, 128
    %458 = vxpose.xlu0.b32.cont [8/16] %v434, 128
    %459 = vxpose.xlu0.b32.cont [9/16] %v436, 128
    %460 = vxpose.xlu0.b32.cont [10/16] %v438, 128
    %461 = vxpose.xlu0.b32.cont [11/16] %v440, 128
    %462 = vxpose.xlu0.b32.cont [12/16] %v442, 128
    %463 = vxpose.xlu0.b32.cont [13/16] %v444, 128
    %464 = vxpose.xlu0.b32.cont [14/16] %v446, 128
    %465 = vxpose.xlu0.b32.cont [15/16] %v448, 128
    %466 = vxpose.xlu0.b32.end [16/16] %v450, 128
    %v467 = vpop.trf.xlu0
    %v468 = vpop.trf.xlu0
    %v469 = vpop.trf.xlu0
    %v470 = vpop.trf.xlu0
    %v471 = vpop.trf.xlu0
    %v472 = vpop.trf.xlu0
    %v473 = vpop.trf.xlu0
    %v474 = vpop.trf.xlu0
    %v475 = vpop.trf.xlu0
    %v476 = vpop.trf.xlu0
    %v477 = vpop.trf.xlu0
    %v478 = vpop.trf.xlu0
    %v479 = vpop.trf.xlu0
    %v480 = vpop.trf.xlu0
    %v481 = vpop.trf.xlu0
    %v482 = vpop.trf.xlu0
    %483 = vst [vmem:[#allocation8] sm:$0x1] %v467
    // Predicated region
    $region30: #{tpu_custom_call.1} parent=1 // pred_check
      _
    $region31: #{tpu_custom_call.1} parent=1 // pred_check_branch
      %485 = sbr.rel (0) target = $region33
    $region32: #{tpu_custom_call.1} parent=1 // pred_region
      %s487 = ssub.s32 16, 16
      %488 = vsyncadd [#allocation5], %s487
      %s490 = sshll.u32 [#allocation8], 4
      %s491 = int_to_ptr.vmem [resolvable:$true] %s490
      %493 = dma.vmem_to_hbm [thread:$0]  %s491, 16, %s5, [#allocation5]
    $region33: #{tpu_custom_call.1} parent=1 // pred_fallthru
      _
    // Predicated region
    $region34: #{tpu_custom_call.1} parent=1 // pred_check
      _
    $region35: #{tpu_custom_call.1} parent=1 // pred_check_branch
      %495 = sbr.rel (0) target = $region37
    $region36: #{tpu_custom_call.1} parent=1 // pred_region
      %496 = dma.done [#allocation5], 16
    $region37: #{tpu_custom_call.1} parent=1 // pred_fallthru
      _
    %497 = vsyncpa [#allocation4], 1
    %498 = vsyncpa [#allocation7], 1
    %499 = vsyncpa [#allocation5], 1

</llo_original>
